<compile_context>
chip_gen: v5e
topology: v5e:2x2
jax: 0.10.0
libtpu: 0.0.40
codegen_flags: <defaults>
</compile_context>

<pallas_src>
import numpy as np
import jax
import jax.numpy as jnp
from jax.experimental import pallas as pl
from jax.experimental.pallas import tpu as pltpu

LANE = 128
TARGET_BLOCK_BYTES = 2 * 1024 * 1024  # ~2 MiB per block, see header comment.


def build_grid(resolution):
    """Same as the PyTorch build_grid, in numpy -> jnp. Returns [1, H, W, 4]."""
    ranges = [np.linspace(0.0, 1.0, num=res) for res in resolution]
    grid = np.meshgrid(*ranges, sparse=False, indexing="ij")
    grid = np.stack(grid, axis=-1)
    grid = np.reshape(grid, [resolution[0], resolution[1], -1])
    grid = np.expand_dims(grid, axis=0).astype(np.float32)
    grid = np.concatenate([grid, 1.0 - grid], axis=-1)  # [1, H, W, 4]
    return jnp.asarray(grid)


def _add_kernel(emb_ref, x_ref, o_ref):
    # Works for both layouts:
    #   row path:   emb (rt, LANE),    x/o (rt, LANE)          (batch squeezed)
    #   batch path: emb (rows, LANE),  x/o (bt, rows, LANE)    (broadcast add)
    o_ref[...] = x_ref[...] + emb_ref[...]


def _sublane_multiple(dtype):
    """Sublane packing multiple: 8 for 4-byte, 16 for 2-byte, 32 for 1-byte."""
    return max(8, 32 // np.dtype(dtype).itemsize)


def soft_position_embed(inputs, weight, bias, resolution, *, donate_inputs=False):
    """inputs: [B, H, W, hidden] (NHWC). weight: [hidden, 4], bias: [hidden]
    (PyTorch nn.Linear convention). Returns [B, H, W, hidden]."""
    B, H, W, C = inputs.shape
    assert resolution == (H, W)
    HW = H * W
    dtype = inputs.dtype
    itemsize = np.dtype(dtype).itemsize
    sub = _sublane_multiple(dtype)

    # Batch-invariant position embedding, computed exactly once in f32.
    grid2d = build_grid(resolution).reshape(HW, 4)                      # [HW, 4]
    emb = (jnp.dot(grid2d, jnp.transpose(weight).astype(jnp.float32))
           + bias.astype(jnp.float32))                                  # [HW, C] f32
    # NOTE: for bf16/fp8 inputs the embedding is rounded to the input dtype
    # before the add (slightly diverges from an all-f32 reference).
    emb = emb.astype(dtype)

    # Lane-dense [rows, 128] view; zero-pad the flattened stream if needed so
    # the output lane dim is always exactly 128 (no masked partial stores).
    N = HW * C
    N_pad = pl.cdiv(N, LANE) * LANE
    rows = N_pad // LANE
    x_flat = inputs.reshape(B, N)
    emb_flat = emb.reshape(N)
    if N_pad != N:
        x_flat = jnp.pad(x_flat, ((0, 0), (0, N_pad - N)))
        emb_flat = jnp.pad(emb_flat, (0, N_pad - N))
    x3 = x_flat.reshape(B, rows, LANE)
    emb2 = emb_flat.reshape(rows, LANE)

    per_batch_bytes = rows * LANE * itemsize
    io_alias = {1: 0} if donate_inputs else {}

    if per_batch_bytes >= TARGET_BLOCK_BYTES:
        # Large per-batch stream: tile rows (cdiv -> ragged last block is fine
        # for an elementwise add); batch innermost so emb's block index stays
        # constant and its DMA is not re-issued per batch element.
        rt = (TARGET_BLOCK_BYTES // (LANE * itemsize)) // sub * sub
        rt = max(sub, min(rt, rows))
        num_r = pl.cdiv(rows, rt)
        out = pl.pallas_call(
            _add_kernel,
            out_shape=jax.ShapeDtypeStruct((B, rows, LANE), dtype),
            grid_spec=pltpu.PrefetchScalarGridSpec(
                num_scalar_prefetch=0,
                grid=(num_r, B),
                in_specs=[
                    pl.BlockSpec((rt, LANE), lambda r, b: (r, 0)),           # emb (shared)
                    pl.BlockSpec((None, rt, LANE), lambda r, b: (b, r, 0)),  # x (per batch)
                ],
                out_specs=pl.BlockSpec((None, rt, LANE), lambda r, b: (b, r, 0)),
            ),
            compiler_params=pltpu.CompilerParams(
                dimension_semantics=("parallel", "parallel")),
            input_output_aliases=io_alias,
        )(emb2, x3)
    else:
        # Small per-batch stream: tile over batch so each step still moves a
        # multi-MiB block; emb is a single full-extent block with a constant
        # index map (stays VMEM-resident, never re-DMA'd).
        bt = max(1, TARGET_BLOCK_BYTES // per_batch_bytes)
        if B >= 2:
            bt = min(bt, pl.cdiv(B, 2))  # >= 2 grid steps so both v7x cores stream
        bt = min(bt, B)
        num_b = pl.cdiv(B, bt)
        out = pl.pallas_call(
            _add_kernel,
            out_shape=jax.ShapeDtypeStruct((B, rows, LANE), dtype),
            grid_spec=pltpu.PrefetchScalarGridSpec(
                num_scalar_prefetch=0,
                grid=(num_b,),
                in_specs=[
                    pl.BlockSpec((rows, LANE), lambda b: (0, 0)),        # emb (resident)
                    pl.BlockSpec((bt, rows, LANE), lambda b: (b, 0, 0)), # x (batch tile)
                ],
                out_specs=pl.BlockSpec((bt, rows, LANE), lambda b: (b, 0, 0)),
            ),
            compiler_params=pltpu.CompilerParams(
                dimension_semantics=("parallel",)),
            input_output_aliases=io_alias,
        )(emb2, x3)

    out_flat = out.reshape(B, N_pad)
    if N_pad != N:
        out_flat = out_flat[:, :N]
    return out_flat.reshape(B, H, W, C)


def _reference(inputs, weight, bias, resolution):
    grid = build_grid(resolution)                      # [1, H, W, 4]
    emb = jnp.einsum("bhwi,oi->bhwo", grid, weight.astype(jnp.float32)) \
        + bias.astype(jnp.float32)
    return inputs + emb.astype(inputs.dtype)


def _run_case(key, B, H, W, hidden, dtype=jnp.float32):
    k_x, k_w, k_b = jax.random.split(key, 3)
    resolution = (H, W)
    inputs = jax.random.normal(k_x, (B, H, W, hidden), dtype=dtype)
    weight = (jax.random.normal(k_w, (hidden, 4), dtype=jnp.float32) * 0.5)
    bias = (jax.random.normal(k_b, (hidden,), dtype=jnp.float32) * 0.1)
    out = soft_position_embed(inputs, weight, bias, resolution)
    out = jax.block_until_ready(out)
    ref = _reference(inputs, weight, bias, resolution)
    np.testing.assert_allclose(np.asarray(out, dtype=np.float32),
                               np.asarray(ref, dtype=np.float32),
                               rtol=1e-5, atol=1e-5)


if __name__ == "__main__":
    key = jax.random.PRNGKey(0)
    k0, k1, k2 = jax.random.split(key, 3)

    # Main small-shape case (batch-tiled path).
    _run_case(k0, B=2, H=16, W=16, hidden=32)

    # Lane-padding path: HW*hidden not a multiple of 128.
    _run_case(k1, B=2, H=6, W=6, hidden=5)

    # Row-tiled path with a ragged last row block (per-batch stream > 2 MiB).
    _run_case(k2, B=1, H=64, W=64, hidden=160)

    print("KERNEL_OK")
</pallas_src>

<mosaic_0001>
module attributes {stable_mosaic.version = 11 : i64} {
  func.func @_add_kernel(%arg0: i32, %arg1: memref<64x128xf32, #tpu.memory_space<vmem>>, %arg2: memref<1x64x128xf32, #tpu.memory_space<vmem>>, %arg3: memref<1x64x128xf32, #tpu.memory_space<vmem>>) attributes {dimension_semantics = [#tpu.dimension_semantics<parallel>], iteration_bounds = array<i64: 2>, scalar_prefetch = 0 : i64, scratch_operands = 0 : i64, tpu.core_type = #tpu.core_type<tc>, window_params = [{pipeline_mode = #tpu.pipeline_mode<synchronous>, transform_indices = @transform_0, window_bounds = array<i64: 64, 128>}, {transform_indices = @transform_1, window_bounds = array<i64: 1, 64, 128>}, {transform_indices = @transform_2, window_bounds = array<i64: 1, 64, 128>}]} {
    %c0 = arith.constant 0 : index
    %c0_0 = arith.constant 0 : index
    %c0_1 = arith.constant 0 : index
    %0 = vector.load %arg2[%c0, %c0_0, %c0_1] : memref<1x64x128xf32, #tpu.memory_space<vmem>>, vector<1x64x128xf32>
    %c0_2 = arith.constant 0 : index
    %c0_3 = arith.constant 0 : index
    %1 = vector.load %arg1[%c0_2, %c0_3] : memref<64x128xf32, #tpu.memory_space<vmem>>, vector<64x128xf32>
    %2 = vector.shape_cast %1 : vector<64x128xf32> to vector<1x64x128xf32>
    %3 = arith.addf %0, %2 : vector<1x64x128xf32>
    %c0_4 = arith.constant 0 : index
    %c0_5 = arith.constant 0 : index
    %c0_6 = arith.constant 0 : index
    %4 = vector.load %arg3[%c0_4, %c0_5, %c0_6] : memref<1x64x128xf32, #tpu.memory_space<vmem>>, vector<1x64x128xf32>
    tpu.vector_store %arg3[%c0_4, %c0_5, %c0_6], %3 {strides = array<i32>} : memref<1x64x128xf32, #tpu.memory_space<vmem>>, vector<1x64x128xf32>,
    return
  }
  func.func @transform_0(%arg0: i32) -> (i32, i32) {
    %c0_i32 = arith.constant 0 : i32
    %c0_i32_0 = arith.constant 0 : i32
    %c0_i32_1 = arith.constant 0 : i32
    return %c0_i32, %c0_i32_0 : i32, i32
  }
  func.func @transform_1(%arg0: i32) -> (i32, i32, i32) {
    %c0_i32 = arith.constant 0 : i32
    %c0_i32_0 = arith.constant 0 : i32
    %c0_i32_1 = arith.constant 0 : i32
    return %arg0, %c0_i32, %c0_i32_0 : i32, i32, i32
  }
  func.func @transform_2(%arg0: i32) -> (i32, i32, i32) {
    %c0_i32 = arith.constant 0 : i32
    %c0_i32_0 = arith.constant 0 : i32
    %c0_i32_1 = arith.constant 0 : i32
    return %arg0, %c0_i32, %c0_i32_0 : i32, i32, i32
  }
}

</mosaic_0001>

<llo_original>
// kernel: tpu_custom_call.1
$region0: #{tpu_custom_call.1}
  #allocation0 [shape = 'u32[]', space=smem, size = 0x4, offset = 0x4, fixed_abs, tag = 'smem constant byte address 0x4 - core index']
  #allocation1 [shape = 'u32[72,128]{1,0:T(1,128)}', space=vmem, size = 0x9000, scoped, tag = 'internal scratch']
  %s0 = inlined_call_operand.hbm [shape: f32[64,128], index: 0, kind: input, shape index: {}]
  %s1 = inlined_call_operand.hbm [shape: f32[2,64,128], index: 1, kind: input, shape index: {}]
  %s2 = inlined_call_operand.hbm [shape: f32[2,64,128], index: 2, kind: output, shape index: {}]
  %s3 = sld [smem:[#allocation0]]
  $region49: #{tpu_custom_call.1} parent=0
    _
  %s5 = ssub.s32 1, %s3
  %s6 = scalar_select 0, %s5, %s3
  $region1: #{tpu_custom_call.1} parent=0
    #allocation2 [shape = 'u8[32768]{0}', space=vmem, size = 0x8000, scoped, tag = 'input window, operand 0, single buffered']
    #allocation3 [shape = 's32[2]{0}', space=sflag, size = 0x8, scoped, tag = 'scoped memory for tpu_custom_call.1']
    #allocation4 [shape = 's32[2]{0}', space=sflag, size = 0x8, scoped, tag = 'scoped memory for tpu_custom_call.1']
    #allocation5 [shape = 'u8[65536]{0}', space=vmem, size = 0x10000, scoped, tag = 'input window, operand 1']
    #allocation6 [shape = 's32[2]{0}', space=sflag, size = 0x8, scoped, tag = 'scoped memory for tpu_custom_call.1']
    #allocation7 [shape = 'u8[65536]{0}', space=vmem, size = 0x10000, scoped, tag = 'output window, operand 0']
    %7 = vsyncpa [#allocation3], 0
    %8 = vsyncpa [#allocation6], 0
    %s9 = scalar_lea.sflag [#allocation6], 1
    %10 = vsyncpa %s9, 0
    %11 = vsyncpa [#allocation4], 0
    %s12 = scalar_lea.sflag [#allocation4], 1
    %13 = vsyncpa %s12, 0
    loop: start=0, step=1, limit=4
    $region2: #{tpu_custom_call.1} parent=1 // loop_pre_header
      _
    $region3: #{tpu_custom_call.1} parent=1 // loop_header
      %s15 = sphi 0, %s19
      %p16 = scmp.ge.s32.totalorder %s15, 4
      %s23 = sphi 0, %s23
      %s25 = sphi 0, %s23
      %s26 = sphi 0, %s25
      %s40 = sphi 0, %s26
      %s46 = sphi 0, %s48
      %s49 = sphi 0, %s46
      %s50 = sphi 0, %s49
      %s66 = sphi 0, %s50
      %s72 = sphi 0, %s74
      %s75 = sphi 0, %s72
      %s76 = sphi 0, %s75
      %s92 = sphi 0, %s76
    $region4: #{tpu_custom_call.1} parent=1 // loop_header_branch
      %18 = sbr.rel (%p16) target = $region8
    $region5: #{tpu_custom_call.1} parent=1 // loop_body
      %s20 = ssub.s32 %s15, 1
      %s21 = ssub.s32 %s15, 2
      %s22 = sadd.s32 %s15, 1
      %s24 = sadd.s32 %s23, 1
      %p27 = scmp.eq.s32.totalorder %s15, 1
      %p28 = scmp.ne.s32.totalorder %s23, %s25
      %p29 = scmp.eq.s32.totalorder %s15, 0
      %p30 = por %p28, %p29
      %p31 = scmp.ne.s32.totalorder %s23, %s25
      %p32 = scmp.eq.s32.totalorder %s20, 1
      %p33 = por %p31, %p32
      %p34 = scmp.ne.s32.totalorder %s25, %s26
      %p35 = scmp.eq.s32.totalorder %s20, 0
      %p36 = por %p34, %p35
      %p37 = scmp.ne.s32.totalorder %s25, %s26
      %p38 = scmp.eq.s32.totalorder %s21, 1
      %p39 = por %p37, %p38
      %p41 = scmp.ne.s32.totalorder %s26, %s40
      %p42 = scmp.eq.s32.totalorder %s21, 0
      %p43 = por %p41, %p42
      %s44 = ssub.s32 %s15, %s22
      %p45 = scmp.eq.s32.totalorder %s44, 0
      %s47 = sadd.s32 %s46, 1
      %s48 = scalar_select %p45, %s46, %s47
      %p51 = pneg %p45
      %p52 = scmp.eq.s32.totalorder %s15, 1
      %p53 = por %p51, %p52
      %p54 = scmp.ne.s32.totalorder %s46, %s49
      %p55 = scmp.eq.s32.totalorder %s15, 0
      %p56 = por %p54, %p55
      %p57 = scmp.ne.s32.totalorder %s46, %s49
      %p58 = scmp.eq.s32.totalorder %s20, 1
      %p59 = por %p57, %p58
      %p60 = scmp.ne.s32.totalorder %s49, %s50
      %p61 = scmp.eq.s32.totalorder %s20, 0
      %p62 = por %p60, %p61
      %p63 = scmp.ne.s32.totalorder %s49, %s50
      %p64 = scmp.eq.s32.totalorder %s21, 1
      %p65 = por %p63, %p64
      %p67 = scmp.ne.s32.totalorder %s50, %s66
      %p68 = scmp.eq.s32.totalorder %s21, 0
      %p69 = por %p67, %p68
      %s70 = ssub.s32 %s15, %s22
      %p71 = scmp.eq.s32.totalorder %s70, 0
      %s73 = sadd.s32 %s72, 1
      %s74 = scalar_select %p71, %s72, %s73
      %p77 = pneg %p71
      %p78 = scmp.eq.s32.totalorder %s15, 1
      %p79 = por %p77, %p78
      %p80 = scmp.ne.s32.totalorder %s72, %s75
      %p81 = scmp.eq.s32.totalorder %s15, 0
      %p82 = por %p80, %p81
      %p83 = scmp.ne.s32.totalorder %s72, %s75
      %p84 = scmp.eq.s32.totalorder %s20, 1
      %p85 = por %p83, %p84
      %p86 = scmp.ne.s32.totalorder %s75, %s76
      %p87 = scmp.eq.s32.totalorder %s20, 0
      %p88 = por %p86, %p87
      %p89 = scmp.ne.s32.totalorder %s75, %s76
      %p90 = scmp.eq.s32.totalorder %s21, 1
      %p91 = por %p89, %p90
      %p93 = scmp.ne.s32.totalorder %s76, %s92
      %p94 = scmp.eq.s32.totalorder %s21, 0
      %p95 = por %p93, %p94
      %p96 = scmp.le.s32.totalorder 1, %s15
      %p97 = scmp.lt.s32.totalorder %s15, 3
      %p98 = pnand %p96, %p97
      %p99 = pneg %p98
      // Predicated region
      $region9: #{tpu_custom_call.1} parent=5 // pred_check
        _
      $region10: #{tpu_custom_call.1} parent=5 // pred_check_branch
        %101 = sbr.rel (%p98) target = $region12
      $region11: #{tpu_custom_call.1} parent=5 // pred_region
        %s102 = ssub.s32 %s15, 1
        // Predicated region
        $region13: #{tpu_custom_call.1} parent=11 // pred_check
          %p103 = pneg %p36
        $region14: #{tpu_custom_call.1} parent=11 // pred_check_branch
          %105 = sbr.rel (%p103) target = $region16
        $region15: #{tpu_custom_call.1} parent=11 // pred_region
          %107 = vsyncadd [#allocation3], 0
          %s108 = sshll.u32 %s0, 4
          %s109 = int_to_ptr.hbm [resolvable:$true] %s108
          %s110 = sshll.u32 [#allocation2], 4
          %s111 = int_to_ptr.vmem [resolvable:$true] %s110
          %116 = dma.hbm_to_vmem [thread:$0]  %s109, 1024, %s111, [#allocation3], 128, 128, 8
        $region16: #{tpu_custom_call.1} parent=11 // pred_fallthru
          _
      $region12: #{tpu_custom_call.1} parent=5 // pred_fallthru
        _
      %p117 = scmp.lt.s32.totalorder %s15, 2
      // Predicated region
      $region17: #{tpu_custom_call.1} parent=5 // pred_check
        %p118 = pneg %p117
      $region18: #{tpu_custom_call.1} parent=5 // pred_check_branch
        %120 = sbr.rel (%p118) target = $region20
      $region19: #{tpu_custom_call.1} parent=5 // pred_region
        // Predicated region
        $region21: #{tpu_custom_call.1} parent=19 // pred_check
          %p121 = pneg %p56
        $region22: #{tpu_custom_call.1} parent=19 // pred_check_branch
          %123 = sbr.rel (%p121) target = $region24
        $region23: #{tpu_custom_call.1} parent=19 // pred_region
          %s124 = sand.u32 %s46, 1
          %s125 = scalar_lea.sflag [#allocation6], %s124
          %s126 = sand.u32 %s46, 1
          %s127 = smul.addr %s126, 64
          %s128 = scalar_lea.vmem [#allocation5], %s127
          %130 = vsyncadd %s125, 0
          %s131 = smul.addr %s15, 8
          %s132 = smul.addr %s131, 8
          %s133 = scalar_lea.hbm %s1, %s132
          %s134 = sshll.u32 %s133, 4
          %s135 = int_to_ptr.hbm [resolvable:$true] %s134
          %s136 = sshll.u32 %s128, 4
          %s137 = int_to_ptr.vmem [resolvable:$true] %s136
          %142 = dma.hbm_to_vmem [thread:$0]  %s135, 1024, %s137, %s125, 128, 128, 8
        $region24: #{tpu_custom_call.1} parent=19 // pred_fallthru
          _
      $region20: #{tpu_custom_call.1} parent=5 // pred_fallthru
        _
      %p143 = scmp.le.s32.totalorder 1, %s15
      %p144 = scmp.lt.s32.totalorder %s15, 3
      %p145 = pnand %p143, %p144
      %p146 = pneg %p145
      // Predicated region
      $region25: #{tpu_custom_call.1} parent=5 // pred_check
        _
      $region26: #{tpu_custom_call.1} parent=5 // pred_check_branch
        %148 = sbr.rel (%p145) target = $region28
      $region27: #{tpu_custom_call.1} parent=5 // pred_region
        %s149 = ssub.s32 %s15, 1
        // Predicated region
        $region29: #{tpu_custom_call.1} parent=27 // pred_check
          %p150 = pneg %p36
        $region30: #{tpu_custom_call.1} parent=27 // pred_check_branch
          %152 = sbr.rel (%p150) target = $region32
        $region31: #{tpu_custom_call.1} parent=27 // pred_region
          %154 = dma.done [#allocation3], 1024
        $region32: #{tpu_custom_call.1} parent=27 // pred_fallthru
          _
        %s155 = sand.u32 %s49, 1
        %s156 = scalar_lea.sflag [#allocation6], %s155
        %s157 = sand.u32 %s49, 1
        %s158 = smul.addr %s157, 64
        %s159 = scalar_lea.vmem [#allocation5], %s158
        // Predicated region
        $region33: #{tpu_custom_call.1} parent=27 // pred_check
          %p160 = pneg %p62
        $region34: #{tpu_custom_call.1} parent=27 // pred_check_branch
          %162 = sbr.rel (%p160) target = $region36
        $region35: #{tpu_custom_call.1} parent=27 // pred_region
          %164 = dma.done %s156, 1024
        $region36: #{tpu_custom_call.1} parent=27 // pred_fallthru
          _
        %p165 = pneg %p36
        %p166 = pneg %p33
        %s167 = sand.u32 %s49, 1
        %s168 = scalar_lea.sflag [#allocation6], %s167
        %s169 = sand.u32 %s49, 1
        %s170 = smul.addr %s169, 64
        %s171 = scalar_lea.vmem [#allocation5], %s170
        %p172 = pneg %p62
        %p173 = pneg %p59
        %p174 = pneg %p88
        %p175 = pneg %p85
        %s176 = sand.u32 %s75, 1
        %s177 = scalar_lea.sflag [#allocation4], %s176
        %s178 = sand.u32 %s75, 1
        %s179 = smul.addr %s178, 64
        %s180 = scalar_lea.vmem [#allocation7], %s179
        %v181 = vld [vmem:[%s159] sm:$0xff]
        %v182 = vld [vmem:[%s159 + $0x8] sm:$0xff]
        %v183 = vld [vmem:[%s159 + $0x10] sm:$0xff]
        %v184 = vld [vmem:[%s159 + $0x18] sm:$0xff]
        %v185 = vld [vmem:[%s159 + $0x20] sm:$0xff]
        %v186 = vld [vmem:[%s159 + $0x28] sm:$0xff]
        %v187 = vld [vmem:[%s159 + $0x30] sm:$0xff]
        %v188 = vld [vmem:[%s159 + $0x38] sm:$0xff]
        %v189 = vld [vmem:[#allocation2] sm:$0xff]
        %v190 = vld [vmem:[#allocation2 + $0x8] sm:$0xff]
        %v191 = vld [vmem:[#allocation2 + $0x10] sm:$0xff]
        %v192 = vld [vmem:[#allocation2 + $0x18] sm:$0xff]
        %v193 = vld [vmem:[#allocation2 + $0x20] sm:$0xff]
        %v194 = vld [vmem:[#allocation2 + $0x28] sm:$0xff]
        %v195 = vld [vmem:[#allocation2 + $0x30] sm:$0xff]
        %v196 = vld [vmem:[#allocation2 + $0x38] sm:$0xff]
        %v197 = vadd.f32 %v181, %v189
        %v198 = vadd.f32 %v182, %v190
        %v199 = vadd.f32 %v183, %v191
        %v200 = vadd.f32 %v184, %v192
        %v201 = vadd.f32 %v185, %v193
        %v202 = vadd.f32 %v186, %v194
        %v203 = vadd.f32 %v187, %v195
        %v204 = vadd.f32 %v188, %v196
        %205 = vst [vmem:[%s180] sm:$0xff] %v197
        %206 = vst [vmem:[%s180 + $0x8] sm:$0xff] %v198
        %207 = vst [vmem:[%s180 + $0x10] sm:$0xff] %v199
        %208 = vst [vmem:[%s180 + $0x18] sm:$0xff] %v200
        %209 = vst [vmem:[%s180 + $0x20] sm:$0xff] %v201
        %210 = vst [vmem:[%s180 + $0x28] sm:$0xff] %v202
        %211 = vst [vmem:[%s180 + $0x30] sm:$0xff] %v203
        %212 = vst [vmem:[%s180 + $0x38] sm:$0xff] %v204
        %s213 = sand.u32 %s75, 1
        %s214 = scalar_lea.sflag [#allocation4], %s213
        %s215 = sand.u32 %s75, 1
        %s216 = smul.addr %s215, 64
        %s217 = scalar_lea.vmem [#allocation7], %s216
        // Predicated region
        $region37: #{tpu_custom_call.1} parent=27 // pred_check
          %p218 = pneg %p85
        $region38: #{tpu_custom_call.1} parent=27 // pred_check_branch
          %220 = sbr.rel (%p218) target = $region40
        $region39: #{tpu_custom_call.1} parent=27 // pred_region
          %222 = vsyncadd %s214, 0
          %s223 = smul.addr %s20, 8
          %s224 = smul.addr %s223, 8
          %s225 = scalar_lea.hbm %s2, %s224
          %s226 = sshll.u32 %s217, 4
          %s227 = int_to_ptr.vmem [resolvable:$true] %s226
          %s228 = sshll.u32 %s225, 4
          %s229 = int_to_ptr.hbm [resolvable:$true] %s228
          %234 = dma.vmem_to_hbm [thread:$0]  %s227, 1024, %s229, %s214, 128, 128, 8
        $region40: #{tpu_custom_call.1} parent=27 // pred_fallthru
          _
      $region28: #{tpu_custom_call.1} parent=5 // pred_fallthru
        _
      %p235 = scmp.le.s32.totalorder 2, %s15
      // Predicated region
      $region41: #{tpu_custom_call.1} parent=5 // pred_check
        %p236 = pneg %p235
      $region42: #{tpu_custom_call.1} parent=5 // pred_check_branch
        %238 = sbr.rel (%p236) target = $region44
      $region43: #{tpu_custom_call.1} parent=5 // pred_region
        %s239 = ssub.s32 %s15, 2
        // Predicated region
        $region45: #{tpu_custom_call.1} parent=43 // pred_check
          %p240 = pneg %p91
        $region46: #{tpu_custom_call.1} parent=43 // pred_check_branch
          %242 = sbr.rel (%p240) target = $region48
        $region47: #{tpu_custom_call.1} parent=43 // pred_region
          %s243 = sand.u32 %s76, 1
          %s244 = scalar_lea.sflag [#allocation4], %s243
          %s245 = sand.u32 %s76, 1
          %s246 = smul.addr %s245, 64
          %s247 = scalar_lea.vmem [#allocation7], %s246
          %249 = dma.done %s244, 1024
        $region48: #{tpu_custom_call.1} parent=43 // pred_fallthru
          _
      $region44: #{tpu_custom_call.1} parent=5 // pred_fallthru
        _
    $region6: #{tpu_custom_call.1} parent=1 // loop_footer
      %s19 = sadd.s32 1, %s15
    $region7: #{tpu_custom_call.1} parent=1 // loop_footer_branch
      %14 = sbr.rel target = $region3
    $region8: #{tpu_custom_call.1} parent=1 // loop_exit
      _
    %250 = vsyncpa [#allocation3], 1
    %s251 = scalar_lea.sflag [#allocation3], 1
    %252 = vsyncpa %s251, 1
    %253 = vsyncpa [#allocation6], 1
    %s254 = scalar_lea.sflag [#allocation6], 1
    %255 = vsyncpa %s254, 1
    %256 = vsyncpa [#allocation4], 1
    %s257 = scalar_lea.sflag [#allocation4], 1
    %258 = vsyncpa %s257, 1

</llo_original>
